<compile_context>
chip_gen: v7x
topology: tpu7x:2x2x1
jax: 0.10.0
libtpu: 0.0.40
codegen_flags: <defaults>
</compile_context>

<pallas_src>
import math

import jax
import jax.numpy as jnp
from jax import lax
from jax.experimental import pallas as pl
from jax.experimental.pallas import tpu as pltpu

TEMPERATURE = 0.1
NCE_EPS = 1e-6
BN_EPS = 1e-5        # PyTorch BatchNorm1d default eps
NORM_EPS = 1e-12     # F.normalize default eps


def _round_up(x, m):
    return ((x + m - 1) // m) * m


def _dot_nt(a, b):
    # a @ b.T without an explicit transpose (contract last dims).
    return lax.dot_general(a, b, (((1,), (1,)), ((), ())),
                           preferred_element_type=jnp.float32)


# ---------------------------------------------------------------------------
# Kernel 1: K-tiled backbone GEMM.  grid = (view, K_tiles).
#   x_ref   : (1, B, TK)  bf16 block of the stacked views
#   wnet_ref: (TK, ZIn)   bf16 block of the backbone weight
#   bnet_ref: (1, ZIn)    f32 bias (constant block)
#   h_ref   : (1, B, ZIn) f32 output block (resident across the K axis)
#   acc_ref : (B, ZIn)    f32 VMEM accumulator
# ---------------------------------------------------------------------------
def _backbone_kernel(x_ref, wnet_ref, bnet_ref, h_ref, acc_ref):
    @pl.when(pl.program_id(1) == 0)
    def _():
        acc_ref[...] = jnp.zeros_like(acc_ref)

    acc_ref[...] += jnp.dot(x_ref[0], wnet_ref[...],
                            preferred_element_type=jnp.float32)
    h_ref[0] = acc_ref[...] + bnet_ref[...]


# ---------------------------------------------------------------------------
# Kernel 2: MLP head + BatchNorm1d(batch stats) + ReLU + Linear + L2-normalize
# and the NCE loss for both views.  Everything here is tiny (B x Z tiles) and
# lives fully in VMEM; grid-less single invocation.
# ---------------------------------------------------------------------------
def _head_loss_kernel(h_ref, w1_ref, b1_ref, gamma_ref, beta_ref, w2_ref,
                      loss_ref):
    batch = h_ref.shape[1]
    inv_t = 1.0 / TEMPERATURE

    def project(hv):
        m = jnp.dot(hv.astype(jnp.bfloat16), w1_ref[...],
                    preferred_element_type=jnp.float32) + b1_ref[...]
        mean = jnp.mean(m, axis=0, keepdims=True)
        ctr = m - mean
        var = jnp.mean(ctr * ctr, axis=0, keepdims=True)       # biased var
        y = gamma_ref[...] * ctr * lax.rsqrt(var + BN_EPS) + beta_ref[...]
        y = jnp.maximum(y, 0.0)
        z = jnp.dot(y.astype(jnp.bfloat16), w2_ref[...],
                    preferred_element_type=jnp.float32)
        # F.normalize(dim=-1): rsqrt instead of sqrt + max + divide.
        inv_norm = lax.rsqrt(jnp.sum(z * z, axis=-1, keepdims=True)
                             + NORM_EPS * NORM_EPS)
        return z * inv_norm

    o1 = project(h_ref[0])
    o2 = project(h_ref[1])

    # cov = [o1;o2] @ [o1;o2].T computed block-wise.  s21 == s12.T, so the
    # row-sums of s21 are the column-sums of s12; s11 / s22 are symmetric.
    s11 = jnp.exp(_dot_nt(o1, o1) * inv_t)
    s12 = jnp.exp(_dot_nt(o1, o2) * inv_t)
    s22 = jnp.exp(_dot_nt(o2, o2) * inv_t)

    row_sub = math.e ** (1.0 / TEMPERATURE)
    neg1 = (jnp.sum(s11, axis=-1, keepdims=True)
            + jnp.sum(s12, axis=-1, keepdims=True))             # [B, 1]
    neg2 = (jnp.sum(s22, axis=0, keepdims=True)
            + jnp.sum(s12, axis=0, keepdims=True))              # [1, B]
    neg1 = jnp.maximum(neg1 - row_sub, NCE_EPS)
    neg2 = jnp.maximum(neg2 - row_sub, NCE_EPS)

    # -log(exp(sim_pos/T) / (neg + eps)) == -sim_pos/T + log(neg + eps)
    sim_pos = jnp.sum(o1 * o2, axis=-1, keepdims=True)          # [B, 1]
    t_pos = jnp.sum(sim_pos, axis=0, keepdims=True)             # [1, 1]
    t_n1 = jnp.sum(jnp.log(neg1 + NCE_EPS), axis=0, keepdims=True)
    t_n2 = jnp.sum(jnp.log(neg2 + NCE_EPS), axis=1, keepdims=True)
    loss_ref[...] = (t_n1 + t_n2 - 2.0 * inv_t * t_pos) / jnp.float32(2 * batch)


def simclr_loss(x1_nchw, x2_nchw, params, *, tk=512):
    """Flatten NCHW views, run backbone + head + NCE loss via Pallas."""
    b = x1_nchw.shape[0]
    x1 = x1_nchw.reshape(b, -1)
    x2 = x2_nchw.reshape(b, -1)
    d_in = x1.shape[1]

    wnet = params["wnet"]
    z_in = wnet.shape[1]

    # K tile: multiple of 128 lanes; zero-pad Din so it divides evenly
    # (zero pads contribute nothing to the matmul).
    tk = min(tk, _round_up(d_in, 128))
    d_pad = _round_up(d_in, tk)
    num_k = d_pad // tk

    x = jnp.stack([x1, x2], axis=0).astype(jnp.bfloat16)        # [2, B, Din]
    if d_pad != d_in:
        x = jnp.pad(x, ((0, 0), (0, 0), (0, d_pad - d_in)))
        wnet = jnp.pad(wnet, ((0, d_pad - d_in), (0, 0)))
    wnet = wnet.astype(jnp.bfloat16)
    bnet = params["bnet"].astype(jnp.float32)

    # VMEM budget: double-buffered x / wnet / bnet / h blocks + f32 accumulator
    # (sized so the same tiling also fits v7x's 64 MiB VMEM).
    est = (2 * (b * tk * 2) + 2 * (tk * z_in * 2) + 2 * (z_in * 4)
           + 2 * (b * z_in * 4) + (b * z_in * 4))
    vmem_limit = int(min(48 * 1024 * 1024, max(16 * 1024 * 1024, 2 * est)))

    h = pl.pallas_call(
        _backbone_kernel,
        out_shape=jax.ShapeDtypeStruct((2, b, z_in), jnp.float32),
        grid_spec=pltpu.PrefetchScalarGridSpec(
            num_scalar_prefetch=0,
            grid=(2, num_k),
            in_specs=[
                pl.BlockSpec((1, b, tk), lambda v, k: (v, 0, k)),
                pl.BlockSpec((tk, z_in), lambda v, k: (k, 0)),
                pl.BlockSpec((1, z_in), lambda v, k: (0, 0)),
            ],
            out_specs=pl.BlockSpec((1, b, z_in), lambda v, k: (v, 0, 0)),
            scratch_shapes=[pltpu.VMEM((b, z_in), jnp.float32)],
        ),
        compiler_params=pltpu.CompilerParams(
            dimension_semantics=("parallel", "arbitrary"),
            vmem_limit_bytes=vmem_limit,
        ),
    )(x, wnet, bnet)

    vmem = pl.BlockSpec(memory_space=pltpu.MemorySpace.VMEM)
    head_args = (h,
                 params["w1"].astype(jnp.bfloat16),
                 params["b1"].astype(jnp.float32),
                 params["gamma"].astype(jnp.float32),
                 params["beta"].astype(jnp.float32),
                 params["w2"].astype(jnp.bfloat16))
    loss = pl.pallas_call(
        _head_loss_kernel,
        out_shape=jax.ShapeDtypeStruct((1, 1), jnp.float32),
        in_specs=[vmem] * len(head_args),
        out_specs=vmem,
    )(*head_args)
    return {"SIMCLR_LOSS": loss[0, 0]}


def init_params(key, d_in, z_in, z_mid, z_out):
    ks = jax.random.split(key, 4)
    scale = 0.02
    return {
        "wnet": scale * jax.random.normal(ks[0], (d_in, z_in), jnp.float32),
        "bnet": jnp.zeros((1, z_in), jnp.float32),
        "w1": scale * jax.random.normal(ks[1], (z_in, z_mid), jnp.float32),
        "b1": jnp.zeros((1, z_mid), jnp.float32),
        "gamma": jnp.ones((1, z_mid), jnp.float32),   # BatchNorm1d weight
        "beta": jnp.zeros((1, z_mid), jnp.float32),   # BatchNorm1d bias
        "w2": scale * jax.random.normal(ks[2], (z_mid, z_out), jnp.float32),
    }


if __name__ == "__main__":
    # Two augmented views [B, 3, H, W]; ZInSize/ZMidSize/ZOutSize scaled down.
    B, C, H, W = 8, 3, 16, 16
    D_IN = C * H * W
    Z_IN, Z_MID, Z_OUT = 128, 128, 128

    key = jax.random.PRNGKey(0)
    k_x1, k_x2, k_p = jax.random.split(key, 3)
    s1v1 = jax.random.normal(k_x1, (B, C, H, W), jnp.float32)
    s1v2 = jax.random.normal(k_x2, (B, C, H, W), jnp.float32)
    params = init_params(k_p, D_IN, Z_IN, Z_MID, Z_OUT)

    result = simclr_loss(s1v1, s1v2, params)
    jax.block_until_ready(result["SIMCLR_LOSS"])
    print("KERNEL_OK")
</pallas_src>

<mosaic_0001>
module attributes {stable_mosaic.version = 11 : i64} {
  func.func @_backbone_kernel(%arg0: i32, %arg1: i32, %arg2: memref<1x8x512xbf16, #tpu.memory_space<vmem>>, %arg3: memref<512x128xbf16, #tpu.memory_space<vmem>>, %arg4: memref<1x128xf32, #tpu.memory_space<vmem>>, %arg5: memref<1x8x128xf32, #tpu.memory_space<vmem>>, %arg6: memref<8x128xf32, #tpu.memory_space<vmem>>) attributes {dimension_semantics = [#tpu.dimension_semantics<parallel>, #tpu.dimension_semantics<arbitrary>], iteration_bounds = array<i64: 2, 2>, scalar_prefetch = 0 : i64, scratch_operands = 1 : i64, tpu.core_type = #tpu.core_type<tc>, window_params = [{transform_indices = @transform_0, window_bounds = array<i64: 1, 8, 512>}, {transform_indices = @transform_1, window_bounds = array<i64: 512, 128>}, {pipeline_mode = #tpu.pipeline_mode<synchronous>, transform_indices = @transform_2, window_bounds = array<i64: 1, 128>}, {transform_indices = @transform_3, window_bounds = array<i64: 1, 8, 128>}]} {
    %c0_i32 = arith.constant 0 : i32
    %0 = arith.cmpi eq, %arg1, %c0_i32 : i32
    %1 = arith.extui %0 : i1 to i32
    %c0_i32_0 = arith.constant 0 : i32
    %2 = arith.cmpi ne, %1, %c0_i32_0 : i32
    scf.if %2 {
      %cst_16 = arith.constant 0.000000e+00 : f32
      %17 = vector.broadcast %cst_16 : f32 to vector<8x128xf32>
      %c0_17 = arith.constant 0 : index
      %c0_18 = arith.constant 0 : index
      %18 = vector.load %arg6[%c0_17, %c0_18] : memref<8x128xf32, #tpu.memory_space<vmem>>, vector<8x128xf32>
      tpu.vector_store %arg6[%c0_17, %c0_18], %17 {strides = array<i32>} : memref<8x128xf32, #tpu.memory_space<vmem>>, vector<8x128xf32>,
    } else {
    }
    %c0 = arith.constant 0 : index
    %c0_1 = arith.constant 0 : index
    %3 = vector.load %arg6[%c0, %c0_1] : memref<8x128xf32, #tpu.memory_space<vmem>>, vector<8x128xf32>
    %c0_2 = arith.constant 0 : index
    %c0_3 = arith.constant 0 : index
    %c0_4 = arith.constant 0 : index
    %4 = vector.load %arg2[%c0_2, %c0_3, %c0_4] : memref<1x8x512xbf16, #tpu.memory_space<vmem>>, vector<1x8x512xbf16>
    %5 = vector.shape_cast %4 : vector<1x8x512xbf16> to vector<8x512xbf16>
    %c0_5 = arith.constant 0 : index
    %c0_6 = arith.constant 0 : index
    %6 = vector.load %arg3[%c0_5, %c0_6] : memref<512x128xbf16, #tpu.memory_space<vmem>>, vector<512x128xbf16>
    %cst = arith.constant dense<0.000000e+00> : vector<8x128xf32>
    %7 = tpu.matmul %5, %6, %cst {dimension_numbers = #tpu.dot_dimension_numbers<[1], [0], [0], [1], [0, 0, 1, 1], [], []>} : vector<8x512xbf16>, vector<512x128xbf16>, vector<8x128xf32> -> vector<8x128xf32>
    %8 = arith.addf %3, %7 : vector<8x128xf32>
    %c0_7 = arith.constant 0 : index
    %c0_8 = arith.constant 0 : index
    %9 = vector.load %arg6[%c0_7, %c0_8] : memref<8x128xf32, #tpu.memory_space<vmem>>, vector<8x128xf32>
    tpu.vector_store %arg6[%c0_7, %c0_8], %8 {strides = array<i32>} : memref<8x128xf32, #tpu.memory_space<vmem>>, vector<8x128xf32>,
    %c0_9 = arith.constant 0 : index
    %c0_10 = arith.constant 0 : index
    %10 = vector.load %arg6[%c0_9, %c0_10] : memref<8x128xf32, #tpu.memory_space<vmem>>, vector<8x128xf32>
    %c0_11 = arith.constant 0 : index
    %c0_12 = arith.constant 0 : index
    %11 = vector.load %arg4[%c0_11, %c0_12] : memref<1x128xf32, #tpu.memory_space<vmem>>, vector<1x128xf32>
    %12 = vector.broadcast %11 : vector<1x128xf32> to vector<8x128xf32>
    %13 = arith.addf %10, %12 : vector<8x128xf32>
    %c0_13 = arith.constant 0 : index
    %c0_14 = arith.constant 0 : index
    %c0_15 = arith.constant 0 : index
    %14 = vector.load %arg5[%c0_13, %c0_14, %c0_15] : memref<1x8x128xf32, #tpu.memory_space<vmem>>, vector<1x8x128xf32>
    %15 = vector.shape_cast %14 : vector<1x8x128xf32> to vector<8x128xf32>
    %16 = vector.shape_cast %13 : vector<8x128xf32> to vector<1x8x128xf32>
    tpu.vector_store %arg5[%c0_13, %c0_14, %c0_15], %16 {strides = array<i32>} : memref<1x8x128xf32, #tpu.memory_space<vmem>>, vector<1x8x128xf32>,
    return
  }
  func.func @transform_0(%arg0: i32, %arg1: i32) -> (i32, i32, i32) {
    %c0_i32 = arith.constant 0 : i32
    %c0_i32_0 = arith.constant 0 : i32
    return %arg0, %c0_i32, %arg1 : i32, i32, i32
  }
  func.func @transform_1(%arg0: i32, %arg1: i32) -> (i32, i32) {
    %c0_i32 = arith.constant 0 : i32
    %c0_i32_0 = arith.constant 0 : i32
    return %arg1, %c0_i32 : i32, i32
  }
  func.func @transform_2(%arg0: i32, %arg1: i32) -> (i32, i32) {
    %c0_i32 = arith.constant 0 : i32
    %c0_i32_0 = arith.constant 0 : i32
    %c0_i32_1 = arith.constant 0 : i32
    return %c0_i32, %c0_i32_0 : i32, i32
  }
  func.func @transform_3(%arg0: i32, %arg1: i32) -> (i32, i32, i32) {
    %c0_i32 = arith.constant 0 : i32
    %c0_i32_0 = arith.constant 0 : i32
    %c0_i32_1 = arith.constant 0 : i32
    return %arg0, %c0_i32, %c0_i32_0 : i32, i32, i32
  }
}

</mosaic_0001>

<llo_original>
// kernel: tpu_custom_call.1
$region0: #{tpu_custom_call.1}
  #allocation0 [shape = 'u32[]', space=smem, size = 0x4, offset = 0x4, fixed_abs, tag = 'smem constant byte address 0x4 - core index']
  #allocation1 [shape = 'u32[144,128]{1,0:T(1,128)}', space=vmem, size = 0x12000, scoped, tag = 'internal scratch']
  #allocation2 [shape = 'f32[8,128]{1,0:T(8,128)}', space=vmem, size = 0x1000, scoped, tag = 'scratch operand']
  %s0 = inlined_call_operand.hbm [shape: bf16[2,8,1024], index: 0, kind: input, shape index: {}]
  %s1 = inlined_call_operand.hbm [shape: bf16[1024,128], index: 1, kind: input, shape index: {}]
  %s2 = inlined_call_operand.vmem [shape: f32[1,128], index: 2, kind: input, shape index: {}]
  %s3 = inlined_call_operand.hbm [shape: f32[2,8,128], index: 3, kind: output, shape index: {}]
  %s4 = sld [smem:[#allocation0]]
  $region57: #{tpu_custom_call.1} parent=0
    _
  %s6 = ssub.s32 1, %s4
  %s7 = scalar_select 0, %s6, %s4
  $region1: #{tpu_custom_call.1} parent=0
    #allocation3 [shape = 'u8[16384]{0}', space=vmem, size = 0x4000, scoped, tag = 'input window, operand 0']
    #allocation4 [shape = 's32[2]{0}', space=sflag, size = 0x8, scoped, tag = 'scoped memory for tpu_custom_call.1']
    #allocation5 [shape = 's32[2]{0}', space=sflag, size = 0x8, scoped, tag = 'scoped memory for tpu_custom_call.1']
    #allocation6 [shape = 'u8[262144]{0}', space=vmem, size = 0x40000, scoped, tag = 'input window, operand 1']
    #allocation7 [shape = 's32[2]{0}', space=sflag, size = 0x8, scoped, tag = 'scoped memory for tpu_custom_call.1']
    #allocation8 [shape = 'u8[8192]{0}', space=vmem, size = 0x2000, scoped, tag = 'output window, operand 0']
    %8 = vsyncpa [#allocation4], 0
    %s9 = scalar_lea.sflag [#allocation4], 1
    %10 = vsyncpa %s9, 0
    %11 = vsyncpa [#allocation7], 0
    %s12 = scalar_lea.sflag [#allocation7], 1
    %13 = vsyncpa %s12, 0
    %14 = vsyncpa [#allocation5], 0
    %s15 = scalar_lea.sflag [#allocation5], 1
    %16 = vsyncpa %s15, 0
    loop: start=0, step=1, limit=6
    $region2: #{tpu_custom_call.1} parent=1 // loop_pre_header
      _
    $region3: #{tpu_custom_call.1} parent=1 // loop_header
      %s18 = sphi 0, %s22
      %p19 = scmp.ge.s32.totalorder %s18, 6
      %s25 = sphi 0, %s37
      %s26 = sphi 0, %s33
      %s27 = sphi 0, %s25
      %s28 = sphi 0, %s26
      %s29 = sphi 0, %s27
      %s30 = sphi 0, %s28
      %s42 = sphi 0, %s44
      %s45 = sphi 0, %s42
      %s46 = sphi 0, %s45
      %s62 = sphi 0, %s46
      %s68 = sphi 0, %s70
      %s71 = sphi 0, %s68
      %s72 = sphi 0, %s71
      %s88 = sphi 0, %s72
      %s92 = sphi 0, %s92
      %s94 = sphi 0, %s92
      %s95 = sphi 0, %s94
      %s109 = sphi 0, %s95
      %s115 = sphi 0, %s117
      %s118 = sphi 0, %s115
      %s119 = sphi 0, %s118
      %s135 = sphi 0, %s119
    $region4: #{tpu_custom_call.1} parent=1 // loop_header_branch
      %21 = sbr.rel (%p19) target = $region8
    $region5: #{tpu_custom_call.1} parent=1 // loop_body
      %s23 = ssub.s32 %s18, 1
      %s24 = ssub.s32 %s18, 2
      %s31 = sadd.s32 1, %s26
      %p32 = scmp.ge.s32.totalorder %s31, 2
      %s33 = scalar_select %p32, 0, %s31
      %s34 = sadd.s32 1, %s25
      %s35 = scalar_select %p32, %s34, %s25
      %p36 = scmp.ge.s32.totalorder %s35, 2
      %s37 = scalar_select %p36, 0, %s35
      %s38 = ssub.s32 %s25, %s37
      %s39 = ssub.s32 %s26, %s33
      %s40 = sor.u32 %s38, %s39
      %p41 = scmp.eq.s32.totalorder %s40, 0
      %s43 = sadd.s32 %s42, 1
      %s44 = scalar_select %p41, %s42, %s43
      %p47 = pneg %p41
      %p48 = scmp.eq.s32.totalorder %s18, 3
      %p49 = por %p47, %p48
      %p50 = scmp.ne.s32.totalorder %s42, %s45
      %p51 = scmp.eq.s32.totalorder %s18, 0
      %p52 = por %p50, %p51
      %p53 = scmp.ne.s32.totalorder %s42, %s45
      %p54 = scmp.eq.s32.totalorder %s23, 3
      %p55 = por %p53, %p54
      %p56 = scmp.ne.s32.totalorder %s45, %s46
      %p57 = scmp.eq.s32.totalorder %s23, 0
      %p58 = por %p56, %p57
      %p59 = scmp.ne.s32.totalorder %s45, %s46
      %p60 = scmp.eq.s32.totalorder %s24, 3
      %p61 = por %p59, %p60
      %p63 = scmp.ne.s32.totalorder %s46, %s62
      %p64 = scmp.eq.s32.totalorder %s24, 0
      %p65 = por %p63, %p64
      %s66 = ssub.s32 %s26, %s33
      %p67 = scmp.eq.s32.totalorder %s66, 0
      %s69 = sadd.s32 %s68, 1
      %s70 = scalar_select %p67, %s68, %s69
      %p73 = pneg %p67
      %p74 = scmp.eq.s32.totalorder %s18, 3
      %p75 = por %p73, %p74
      %p76 = scmp.ne.s32.totalorder %s68, %s71
      %p77 = scmp.eq.s32.totalorder %s18, 0
      %p78 = por %p76, %p77
      %p79 = scmp.ne.s32.totalorder %s68, %s71
      %p80 = scmp.eq.s32.totalorder %s23, 3
      %p81 = por %p79, %p80
      %p82 = scmp.ne.s32.totalorder %s71, %s72
      %p83 = scmp.eq.s32.totalorder %s23, 0
      %p84 = por %p82, %p83
      %p85 = scmp.ne.s32.totalorder %s71, %s72
      %p86 = scmp.eq.s32.totalorder %s24, 3
      %p87 = por %p85, %p86
      %p89 = scmp.ne.s32.totalorder %s72, %s88
      %p90 = scmp.eq.s32.totalorder %s24, 0
      %p91 = por %p89, %p90
      %s93 = sadd.s32 %s92, 1
      %p96 = scmp.eq.s32.totalorder %s18, 3
      %p97 = scmp.ne.s32.totalorder %s92, %s94
      %p98 = scmp.eq.s32.totalorder %s18, 0
      %p99 = por %p97, %p98
      %p100 = scmp.ne.s32.totalorder %s92, %s94
      %p101 = scmp.eq.s32.totalorder %s23, 3
      %p102 = por %p100, %p101
      %p103 = scmp.ne.s32.totalorder %s94, %s95
      %p104 = scmp.eq.s32.totalorder %s23, 0
      %p105 = por %p103, %p104
      %p106 = scmp.ne.s32.totalorder %s94, %s95
      %p107 = scmp.eq.s32.totalorder %s24, 3
      %p108 = por %p106, %p107
      %p110 = scmp.ne.s32.totalorder %s95, %s109
      %p111 = scmp.eq.s32.totalorder %s24, 0
      %p112 = por %p110, %p111
      %s113 = ssub.s32 %s25, %s37
      %p114 = scmp.eq.s32.totalorder %s113, 0
      %s116 = sadd.s32 %s115, 1
      %s117 = scalar_select %p114, %s115, %s116
      %p120 = pneg %p114
      %p121 = scmp.eq.s32.totalorder %s18, 3
      %p122 = por %p120, %p121
      %p123 = scmp.ne.s32.totalorder %s115, %s118
      %p124 = scmp.eq.s32.totalorder %s18, 0
      %p125 = por %p123, %p124
      %p126 = scmp.ne.s32.totalorder %s115, %s118
      %p127 = scmp.eq.s32.totalorder %s23, 3
      %p128 = por %p126, %p127
      %p129 = scmp.ne.s32.totalorder %s118, %s119
      %p130 = scmp.eq.s32.totalorder %s23, 0
      %p131 = por %p129, %p130
      %p132 = scmp.ne.s32.totalorder %s118, %s119
      %p133 = scmp.eq.s32.totalorder %s24, 3
      %p134 = por %p132, %p133
      %p136 = scmp.ne.s32.totalorder %s119, %s135
      %p137 = scmp.eq.s32.totalorder %s24, 0
      %p138 = por %p136, %p137
      %p139 = scmp.le.s32.totalorder 1, %s18
      %p140 = scmp.lt.s32.totalorder %s18, 5
      %p141 = pnand %p139, %p140
      %p142 = pneg %p141
      // Predicated region
      $region9: #{tpu_custom_call.1} parent=5 // pred_check
        _
      $region10: #{tpu_custom_call.1} parent=5 // pred_check_branch
        %144 = sbr.rel (%p141) target = $region12
      $region11: #{tpu_custom_call.1} parent=5 // pred_region
        %s145 = ssub.s32 %s18, 1
        // Predicated region
        $region13: #{tpu_custom_call.1} parent=11 // pred_check
          %p146 = pneg %p105
        $region14: #{tpu_custom_call.1} parent=11 // pred_check_branch
          %148 = sbr.rel (%p146) target = $region16
        $region15: #{tpu_custom_call.1} parent=11 // pred_region
          _
        $region16: #{tpu_custom_call.1} parent=11 // pred_fallthru
          _
      $region12: #{tpu_custom_call.1} parent=5 // pred_fallthru
        _
      %p149 = scmp.lt.s32.totalorder %s18, 4
      // Predicated region
      $region17: #{tpu_custom_call.1} parent=5 // pred_check
        %p150 = pneg %p149
      $region18: #{tpu_custom_call.1} parent=5 // pred_check_branch
        %152 = sbr.rel (%p150) target = $region20
      $region19: #{tpu_custom_call.1} parent=5 // pred_region
        // Predicated region
        $region21: #{tpu_custom_call.1} parent=19 // pred_check
          %p153 = pneg %p52
        $region22: #{tpu_custom_call.1} parent=19 // pred_check_branch
          %155 = sbr.rel (%p153) target = $region24
        $region23: #{tpu_custom_call.1} parent=19 // pred_region
          %s156 = sand.u32 %s42, 1
          %s157 = scalar_lea.sflag [#allocation4], %s156
          %s158 = sand.u32 %s42, 1
          %s159 = smul.addr %s158, 16
          %s160 = scalar_lea.vmem [#allocation3], %s159
          %s161 = smul.u32 4, %s26
          %s163 = ssub.s32 256, 256
          %164 = vsyncadd %s157, %s163
          %s165 = smul.addr %s25, 8
          %s166 = sadd.s32 %s161, %s165
          %s167 = smul.addr %s166, 64
          %s168 = scalar_lea.hbm %s0, %s167
          %s170 = sshll.u32 %s160, 4
          %s171 = int_to_ptr.vmem [resolvable:$true] %s170
          %173 = dma.hbm_to_vmem [thread:$0]  %s168, 256, %s171, %s157
        $region24: #{tpu_custom_call.1} parent=19 // pred_fallthru
          _
        // Predicated region
        $region25: #{tpu_custom_call.1} parent=19 // pred_check
          %p174 = pneg %p78
        $region26: #{tpu_custom_call.1} parent=19 // pred_check_branch
          %176 = sbr.rel (%p174) target = $region28
        $region27: #{tpu_custom_call.1} parent=19 // pred_region
          %s177 = sand.u32 %s68, 1
          %s178 = scalar_lea.sflag [#allocation7], %s177
          %s179 = sand.u32 %s68, 1
          %s180 = smul.addr %s179, 256
          %s181 = scalar_lea.vmem [#allocation6], %s180
          %s182 = smul.u32 64, %s26
          %s184 = ssub.s32 4096, 4096
          %185 = vsyncadd %s178, %s184
          %s186 = smul.addr %s182, 64
          %s187 = scalar_lea.hbm %s1, %s186
          %s188 = sshll.u32 %s181, 4
          %s189 = int_to_ptr.vmem [resolvable:$true] %s188
          %194 = dma.hbm_to_vmem [thread:$0]  %s187, 4096, %s189, %s178, 64, 64, 4
        $region28: #{tpu_custom_call.1} parent=19 // pred_fallthru
          _
      $region20: #{tpu_custom_call.1} parent=5 // pred_fallthru
        _
      %p195 = scmp.le.s32.totalorder 1, %s18
      %p196 = scmp.lt.s32.totalorder %s18, 5
      %p197 = pnand %p195, %p196
      %p198 = pneg %p197
      // Predicated region
      $region29: #{tpu_custom_call.1} parent=5 // pred_check
        _
      $region30: #{tpu_custom_call.1} parent=5 // pred_check_branch
        %200 = sbr.rel (%p197) target = $region32
      $region31: #{tpu_custom_call.1} parent=5 // pred_region
        %s201 = ssub.s32 %s18, 1
        %s202 = sand.u32 %s45, 1
        %s203 = scalar_lea.sflag [#allocation4], %s202
        %s204 = sand.u32 %s45, 1
        %s205 = smul.addr %s204, 16
        %s206 = scalar_lea.vmem [#allocation3], %s205
        // Predicated region
        $region33: #{tpu_custom_call.1} parent=31 // pred_check
          %p207 = pneg %p58
        $region34: #{tpu_custom_call.1} parent=31 // pred_check_branch
          %209 = sbr.rel (%p207) target = $region36
        $region35: #{tpu_custom_call.1} parent=31 // pred_region
          %210 = dma.done %s203, 256
        $region36: #{tpu_custom_call.1} parent=31 // pred_fallthru
          _
        %s211 = sand.u32 %s71, 1
        %s212 = scalar_lea.sflag [#allocation7], %s211
        %s213 = sand.u32 %s71, 1
        %s214 = smul.addr %s213, 256
        %s215 = scalar_lea.vmem [#allocation6], %s214
        // Predicated region
        $region37: #{tpu_custom_call.1} parent=31 // pred_check
          %p216 = pneg %p84
        $region38: #{tpu_custom_call.1} parent=31 // pred_check_branch
          %218 = sbr.rel (%p216) target = $region40
        $region39: #{tpu_custom_call.1} parent=31 // pred_region
          %219 = dma.done %s212, 4096
        $region40: #{tpu_custom_call.1} parent=31 // pred_fallthru
          _
        %s220 = sand.u32 %s45, 1
        %s221 = scalar_lea.sflag [#allocation4], %s220
        %s222 = sand.u32 %s45, 1
        %s223 = smul.addr %s222, 16
        %s224 = scalar_lea.vmem [#allocation3], %s223
        %p225 = pneg %p58
        %p226 = pneg %p55
        %s227 = sand.u32 %s71, 1
        %s228 = scalar_lea.sflag [#allocation7], %s227
        %s229 = sand.u32 %s71, 1
        %s230 = smul.addr %s229, 256
        %s231 = scalar_lea.vmem [#allocation6], %s230
        %p232 = pneg %p84
        %p233 = pneg %p81
        %p234 = pneg %p105
        %p235 = pneg %p102
        %p236 = pneg %p131
        %p237 = pneg %p128
        %s238 = sand.u32 %s118, 1
        %s239 = scalar_lea.sflag [#allocation5], %s238
        %s240 = sand.u32 %s118, 1
        %s241 = smul.addr %s240, 8
        %s242 = scalar_lea.vmem [#allocation8], %s241
        %s243 = smul.u32 4, %s28
        %s244 = smul.u32 64, %s28
        %p246 = scmp.eq.s32.totalorder %s28, 0
        // Predicated region
        $region41: #{tpu_custom_call.1} parent=31 // pred_check
          %p247 = pneg %p246
        $region42: #{tpu_custom_call.1} parent=31 // pred_check_branch
          %249 = sbr.rel (%p247) target = $region44
        $region43: #{tpu_custom_call.1} parent=31 // pred_region
          %250 = vst [vmem:[#allocation2] sm:$0xff] 0.0
        $region44: #{tpu_custom_call.1} parent=31 // pred_fallthru
          _
        %v251 = vld [vmem:[#allocation2] sm:$0xff]
        %v252 = vld [vmem:[%s206] sm:$0xff]
        %v253 = vld [vmem:[%s206 + $0x8] sm:$0xff]
        %v254 = vld [vmem:[%s215] sm:$0xf]
        %v255 = vld [vmem:[%s215 + $0x4] sm:$0xf]
        %v256 = vld [vmem:[%s215 + $0x8] sm:$0xf]
        %v257 = vld [vmem:[%s215 + $0xc] sm:$0xf]
        %v258 = vld [vmem:[%s215 + $0x10] sm:$0xf]
        %v259 = vld [vmem:[%s215 + $0x14] sm:$0xf]
        %v260 = vld [vmem:[%s215 + $0x18] sm:$0xf]
        %v261 = vld [vmem:[%s215 + $0x1c] sm:$0xf]
        %v262 = vld [vmem:[%s215 + $0x20] sm:$0xf]
        %v263 = vld [vmem:[%s215 + $0x24] sm:$0xf]
        %v264 = vld [vmem:[%s215 + $0x28] sm:$0xf]
        %v265 = vld [vmem:[%s215 + $0x2c] sm:$0xf]
        %v266 = vld [vmem:[%s215 + $0x30] sm:$0xf]
        %v267 = vld [vmem:[%s215 + $0x34] sm:$0xf]
        %v268 = vld [vmem:[%s215 + $0x38] sm:$0xf]
        %v269 = vld [vmem:[%s215 + $0x3c] sm:$0xf]
        %v270 = vld [vmem:[%s215 + $0x40] sm:$0xf]
        %v271 = vld [vmem:[%s215 + $0x44] sm:$0xf]
        %v272 = vld [vmem:[%s215 + $0x48] sm:$0xf]
        %v273 = vld [vmem:[%s215 + $0x4c] sm:$0xf]
        %v274 = vld [vmem:[%s215 + $0x50] sm:$0xf]
        %v275 = vld [vmem:[%s215 + $0x54] sm:$0xf]
        %v276 = vld [vmem:[%s215 + $0x58] sm:$0xf]
        %v277 = vld [vmem:[%s215 + $0x5c] sm:$0xf]
        %v278 = vld [vmem:[%s215 + $0x60] sm:$0xf]
        %v279 = vld [vmem:[%s215 + $0x64] sm:$0xf]
        %v280 = vld [vmem:[%s215 + $0x68] sm:$0xf]
        %v281 = vld [vmem:[%s215 + $0x6c] sm:$0xf]
        %v282 = vld [vmem:[%s215 + $0x70] sm:$0xf]
        %v283 = vld [vmem:[%s215 + $0x74] sm:$0xf]
        %v284 = vld [vmem:[%s215 + $0x78] sm:$0xf]
        %v285 = vld [vmem:[%s215 + $0x7c] sm:$0xf]
        %v286 = vld [vmem:[%s215 + $0x80] sm:$0xf]
        %v287 = vld [vmem:[%s215 + $0x84] sm:$0xf]
        %v288 = vld [vmem:[%s215 + $0x88] sm:$0xf]
        %v289 = vld [vmem:[%s215 + $0x8c] sm:$0xf]
        %v290 = vld [vmem:[%s215 + $0x90] sm:$0xf]
        %v291 = vld [vmem:[%s215 + $0x94] sm:$0xf]
        %v292 = vld [vmem:[%s215 + $0x98] sm:$0xf]
        %v293 = vld [vmem:[%s215 + $0x9c] sm:$0xf]
        %v294 = vld [vmem:[%s215 + $0xa0] sm:$0xf]
        %v295 = vld [vmem:[%s215 + $0xa4] sm:$0xf]
        %v296 = vld [vmem:[%s215 + $0xa8] sm:$0xf]
        %v297 = vld [vmem:[%s215 + $0xac] sm:$0xf]
        %v298 = vld [vmem:[%s215 + $0xb0] sm:$0xf]
        %v299 = vld [vmem:[%s215 + $0xb4] sm:$0xf]
        %v300 = vld [vmem:[%s215 + $0xb8] sm:$0xf]
        %v301 = vld [vmem:[%s215 + $0xbc] sm:$0xf]
        %v302 = vld [vmem:[%s215 + $0xc0] sm:$0xf]
        %v303 = vld [vmem:[%s215 + $0xc4] sm:$0xf]
        %v304 = vld [vmem:[%s215 + $0xc8] sm:$0xf]
        %v305 = vld [vmem:[%s215 + $0xcc] sm:$0xf]
        %v306 = vld [vmem:[%s215 + $0xd0] sm:$0xf]
        %v307 = vld [vmem:[%s215 + $0xd4] sm:$0xf]
        %v308 = vld [vmem:[%s215 + $0xd8] sm:$0xf]
        %v309 = vld [vmem:[%s215 + $0xdc] sm:$0xf]
        %v310 = vld [vmem:[%s215 + $0xe0] sm:$0xf]
        %v311 = vld [vmem:[%s215 + $0xe4] sm:$0xf]
        %v312 = vld [vmem:[%s215 + $0xe8] sm:$0xf]
        %v313 = vld [vmem:[%s215 + $0xec] sm:$0xf]
        %v314 = vld [vmem:[%s215 + $0xf0] sm:$0xf]
        %v315 = vld [vmem:[%s215 + $0xf4] sm:$0xf]
        %v316 = vld [vmem:[%s215 + $0xf8] sm:$0xf]
        %v317 = vld [vmem:[%s215 + $0xfc] sm:$0xf]
        %v320 = vunpack.c.l.b16 %v252
        %v321 = vunpack.c.h.b16 %v252
        %v322 = vunpack.c.l.b16 %v253
        %v323 = vunpack.c.h.b16 %v253
        %v324 = vpack.c.b16 %v320, %v320
        %v325 = vpack.c.b16 %v321, %v321
        %v326 = vpack.c.b16 %v322, %v322
        %v327 = vpack.c.b16 %v323, %v323
        %v396 = vunpack.c.l.b16 %v254
        %v397 = vunpack.c.l.b16 %v255
        %v398 = vunpack.c.l.b16 %v256
        %v399 = vunpack.c.l.b16 %v257
        %v400 = vunpack.c.l.b16 %v258
        %v401 = vunpack.c.l.b16 %v259
        %v402 = vunpack.c.l.b16 %v260
        %v403 = vunpack.c.l.b16 %v261
        %v404 = vunpack.c.l.b16 %v262
        %v405 = vunpack.c.l.b16 %v263
        %v406 = vunpack.c.l.b16 %v264
        %v407 = vunpack.c.l.b16 %v265
        %v408 = vunpack.c.l.b16 %v266
        %v409 = vunpack.c.l.b16 %v267
        %v410 = vunpack.c.l.b16 %v268
        %v411 = vunpack.c.l.b16 %v269
        %v412 = vunpack.c.l.b16 %v270
        %v413 = vunpack.c.l.b16 %v271
        %v414 = vunpack.c.l.b16 %v272
        %v415 = vunpack.c.l.b16 %v273
        %v416 = vunpack.c.l.b16 %v274
        %v417 = vunpack.c.l.b16 %v275
        %v418 = vunpack.c.l.b16 %v276
        %v419 = vunpack.c.l.b16 %v277
        %v420 = vunpack.c.l.b16 %v278
        %v421 = vunpack.c.l.b16 %v279
        %v422 = vunpack.c.l.b16 %v280
        %v423 = vunpack.c.l.b16 %v281
        %v424 = vunpack.c.l.b16 %v282
        %v425 = vunpack.c.l.b16 %v283
        %v426 = vunpack.c.l.b16 %v284
        %v427 = vunpack.c.l.b16 %v285
        %v428 = vunpack.c.l.b16 %v286
        %v429 = vunpack.c.l.b16 %v287
        %v430 = vunpack.c.l.b16 %v288
        %v431 = vunpack.c.l.b16 %v289
        %v432 = vunpack.c.l.b16 %v290
        %v433 = vunpack.c.l.b16 %v291
        %v434 = vunpack.c.l.b16 %v292
        %v435 = vunpack.c.l.b16 %v293
        %v436 = vunpack.c.l.b16 %v294
        %v437 = vunpack.c.l.b16 %v295
        %v438 = vunpack.c.l.b16 %v296
        %v439 = vunpack.c.l.b16 %v297
        %v440 = vunpack.c.l.b16 %v298
        %v441 = vunpack.c.l.b16 %v299
        %v442 = vunpack.c.l.b16 %v300
        %v443 = vunpack.c.l.b16 %v301
        %v444 = vunpack.c.l.b16 %v302
        %v445 = vunpack.c.l.b16 %v303
        %v446 = vunpack.c.l.b16 %v304
        %v447 = vunpack.c.l.b16 %v305
        %v448 = vunpack.c.l.b16 %v306
        %v449 = vunpack.c.l.b16 %v307
        %v450 = vunpack.c.l.b16 %v308
        %v451 = vunpack.c.l.b16 %v309
        %v452 = vunpack.c.l.b16 %v310
        %v453 = vunpack.c.l.b16 %v311
        %v454 = vunpack.c.l.b16 %v312
        %v455 = vunpack.c.l.b16 %v313
        %v456 = vunpack.c.l.b16 %v314
        %v457 = vunpack.c.l.b16 %v315
        %v458 = vunpack.c.l.b16 %v316
        %v459 = vunpack.c.l.b16 %v317
        %v460 = vpack.c.b16 %v397, %v396
        %v461 = vpack.c.b16 %v399, %v398
        %v462 = vpack.c.b16 %v401, %v400
        %v463 = vpack.c.b16 %v403, %v402
        %v464 = vpack.c.b16 %v405, %v404
        %v465 = vpack.c.b16 %v407, %v406
        %v466 = vpack.c.b16 %v409, %v408
        %v467 = vpack.c.b16 %v411, %v410
        %v468 = vpack.c.b16 %v413, %v412
        %v469 = vpack.c.b16 %v415, %v414
        %v470 = vpack.c.b16 %v417, %v416
        %v471 = vpack.c.b16 %v419, %v418
        %v472 = vpack.c.b16 %v421, %v420
        %v473 = vpack.c.b16 %v423, %v422
        %v474 = vpack.c.b16 %v425, %v424
        %v475 = vpack.c.b16 %v427, %v426
        %v476 = vpack.c.b16 %v429, %v428
        %v477 = vpack.c.b16 %v431, %v430
        %v478 = vpack.c.b16 %v433, %v432
        %v479 = vpack.c.b16 %v435, %v434
        %v480 = vpack.c.b16 %v437, %v436
        %v481 = vpack.c.b16 %v439, %v438
        %v482 = vpack.c.b16 %v441, %v440
        %v483 = vpack.c.b16 %v443, %v442
        %v484 = vpack.c.b16 %v445, %v444
        %v485 = vpack.c.b16 %v447, %v446
        %v486 = vpack.c.b16 %v449, %v448
        %v487 = vpack.c.b16 %v451, %v450
        %v488 = vpack.c.b16 %v453, %v452
        %v489 = vpack.c.b16 %v455, %v454
        %v490 = vpack.c.b16 %v457, %v456
        %v491 = vpack.c.b16 %v459, %v458
        %524 = vmatprep.subr.bf16.mxu0 0
        %525 = vmatpush1.bf16.msra.mxu0 %v460
        %526 = vmatprep.subr.bf16.mxu0 0
        %527 = vmatpush1.bf16.msra.mxu0 %v461
        %528 = vmatprep.subr.bf16.mxu0 0
        %529 = vmatpush1.bf16.msra.mxu0 %v462
        %530 = vmatprep.subr.bf16.mxu0 0
        %531 = vmatpush1.bf16.msra.mxu0 %v463
        %532 = vmatprep.subr.bf16.mxu0 0
        %533 = vmatpush1.bf16.msra.mxu0 %v464
        %534 = vmatprep.subr.bf16.mxu0 0
        %535 = vmatpush1.bf16.msra.mxu0 %v465
        %536 = vmatprep.subr.bf16.mxu0 0
        %537 = vmatpush1.bf16.msra.mxu0 %v466
        %538 = vmatprep.subr.bf16.mxu0 0
        %539 = vmatpush1.bf16.msra.mxu0 %v467
        %540 = vmatprep.subr.bf16.mxu0 0
        %541 = vmatpush1.bf16.msra.mxu0 %v468
        %542 = vmatprep.subr.bf16.mxu0 0
        %543 = vmatpush1.bf16.msra.mxu0 %v469
        %544 = vmatprep.subr.bf16.mxu0 0
        %545 = vmatpush1.bf16.msra.mxu0 %v470
        %546 = vmatprep.subr.bf16.mxu0 0
        %547 = vmatpush1.bf16.msra.mxu0 %v471
        %548 = vmatprep.subr.bf16.mxu0 0
        %549 = vmatpush1.bf16.msra.mxu0 %v472
        %550 = vmatprep.subr.bf16.mxu0 0
        %551 = vmatpush1.bf16.msra.mxu0 %v473
        %552 = vmatprep.subr.bf16.mxu0 0
        %553 = vmatpush1.bf16.msra.mxu0 %v474
        %554 = vmatprep.subr.bf16.mxu0 0
        %555 = vmatpush1.bf16.msra.mxu0 %v475
        %556 = vmatprep.mubr.bf16.mxu0 %v325
        %557 = vmatmul.mubr.bf16.gmra.mrb[0].mxu0 %v324
        %v558 = vpop.f32.mrb[0].mxu0
        %v559 = vadd.f32 0.0, %v558
        %v560 = vpop.f32.mrb[0].mxu0
        %v561 = vpop.f32.mrb[0].mxu0
        %v562 = vpop.f32.mrb[0].mxu0
        %563 = vdwg.mxu0
        %564 = vmatprep.subr.bf16.mxu0 0
        %565 = vmatpush1.bf16.msra.mxu0 %v476
        %566 = vmatprep.subr.bf16.mxu0 0
        %567 = vmatpush1.bf16.msra.mxu0 %v477
        %568 = vmatprep.subr.bf16.mxu0 0
        %569 = vmatpush1.bf16.msra.mxu0 %v478
        %570 = vmatprep.subr.bf16.mxu0 0
        %571 = vmatpush1.bf16.msra.mxu0 %v479
        %572 = vmatprep.subr.bf16.mxu0 0
        %573 = vmatpush1.bf16.msra.mxu0 %v480
        %574 = vmatprep.subr.bf16.mxu0 0
        %575 = vmatpush1.bf16.msra.mxu0 %v481
        %576 = vmatprep.subr.bf16.mxu0 0
        %577 = vmatpush1.bf16.msra.mxu0 %v482
        %578 = vmatprep.subr.bf16.mxu0 0
        %579 = vmatpush1.bf16.msra.mxu0 %v483
        %580 = vmatprep.subr.bf16.mxu0 0
        %581 = vmatpush1.bf16.msra.mxu0 %v484
        %582 = vmatprep.subr.bf16.mxu0 0
        %583 = vmatpush1.bf16.msra.mxu0 %v485
        %584 = vmatprep.subr.bf16.mxu0 0
        %585 = vmatpush1.bf16.msra.mxu0 %v486
        %586 = vmatprep.subr.bf16.mxu0 0
        %587 = vmatpush1.bf16.msra.mxu0 %v487
        %588 = vmatprep.subr.bf16.mxu0 0
        %589 = vmatpush1.bf16.msra.mxu0 %v488
        %590 = vmatprep.subr.bf16.mxu0 0
        %591 = vmatpush1.bf16.msra.mxu0 %v489
        %592 = vmatprep.subr.bf16.mxu0 0
        %593 = vmatpush1.bf16.msra.mxu0 %v490
        %594 = vmatprep.subr.bf16.mxu0 0
        %595 = vmatpush1.bf16.msra.mxu0 %v491
        %596 = vmatprep.mubr.bf16.mxu0 %v327
        %597 = vmatmul.mubr.bf16.gmra.mrb[0].mxu0 %v326
        %v598 = vpop.f32.mrb[0].mxu0
        %v599 = vadd.f32 %v559, %v598
        %v600 = vpop.f32.mrb[0].mxu0
        %v601 = vpop.f32.mrb[0].mxu0
        %v602 = vpop.f32.mrb[0].mxu0
        %603 = vdwg.mxu0
        %v604 = vadd.f32 %v251, %v599
        %605 = vst [vmem:[#allocation2] sm:$0xff] %v604
        %v606 = vld [vmem:[#allocation2] sm:$0xff]
        %v607 = vld [vmem:[%s2] sm:$0x1]
        %v609 = vlaneseq
        %v610 = vshrl.u32 %v609, 7
        %v611 = vsub.s32 0, %v610
        %v612 = vrot.slane %v607, %v611
        %v614 = vadd.f32 %v606, %v612
        %615 = vst [vmem:[%s242] sm:$0xff] %v614
        %s616 = sand.u32 %s118, 1
        %s617 = scalar_lea.sflag [#allocation5], %s616
        %s618 = sand.u32 %s118, 1
        %s619 = smul.addr %s618, 8
        %s620 = scalar_lea.vmem [#allocation8], %s619
        // Predicated region
        $region45: #{tpu_custom_call.1} parent=31 // pred_check
          %p621 = pneg %p128
        $region46: #{tpu_custom_call.1} parent=31 // pred_check_branch
          %623 = sbr.rel (%p621) target = $region48
        $region47: #{tpu_custom_call.1} parent=31 // pred_region
          %s625 = ssub.s32 128, 128
          %626 = vsyncadd %s617, %s625
          %s627 = smul.addr %s27, 128
          %s628 = scalar_lea.hbm %s3, %s627
          %s630 = sshll.u32 %s620, 4
          %s631 = int_to_ptr.vmem [resolvable:$true] %s630
          %633 = dma.vmem_to_hbm [thread:$0]  %s631, 128, %s628, %s617
        $region48: #{tpu_custom_call.1} parent=31 // pred_fallthru
          _
      $region32: #{tpu_custom_call.1} parent=5 // pred_fallthru
        _
      %p634 = scmp.le.s32.totalorder 2, %s18
      // Predicated region
      $region49: #{tpu_custom_call.1} parent=5 // pred_check
        %p635 = pneg %p634
      $region50: #{tpu_custom_call.1} parent=5 // pred_check_branch
        %637 = sbr.rel (%p635) target = $region52
      $region51: #{tpu_custom_call.1} parent=5 // pred_region
        %s638 = ssub.s32 %s18, 2
        // Predicated region
        $region53: #{tpu_custom_call.1} parent=51 // pred_check
          %p639 = pneg %p134
        $region54: #{tpu_custom_call.1} parent=51 // pred_check_branch
          %641 = sbr.rel (%p639) target = $region56
        $region55: #{tpu_custom_call.1} parent=51 // pred_region
          %s642 = sand.u32 %s119, 1
          %s643 = scalar_lea.sflag [#allocation5], %s642
          %s644 = sand.u32 %s119, 1
          %s645 = smul.addr %s644, 8
          %s646 = scalar_lea.vmem [#allocation8], %s645
          %647 = dma.done %s643, 128
        $region56: #{tpu_custom_call.1} parent=51 // pred_fallthru
          _
      $region52: #{tpu_custom_call.1} parent=5 // pred_fallthru
        _
    $region6: #{tpu_custom_call.1} parent=1 // loop_footer
      %s22 = sadd.s32 1, %s18
    $region7: #{tpu_custom_call.1} parent=1 // loop_footer_branch
      %17 = sbr.rel target = $region3
    $region8: #{tpu_custom_call.1} parent=1 // loop_exit
      _
    %648 = vsyncpa [#allocation4], 1
    %s649 = scalar_lea.sflag [#allocation4], 1
    %650 = vsyncpa %s649, 1
    %651 = vsyncpa [#allocation7], 1
    %s652 = scalar_lea.sflag [#allocation7], 1
    %653 = vsyncpa %s652, 1
    %654 = vsyncpa [#allocation5], 1
    %s655 = scalar_lea.sflag [#allocation5], 1
    %656 = vsyncpa %s655, 1

</llo_original>
